<compile_context>
chip_gen: v7x
topology: tpu7x:2x2x1
jax: 0.10.0
libtpu: 0.0.40
codegen_flags: <defaults>
</compile_context>

<pallas_src>
import functools

import jax
import jax.numpy as jnp
from jax.experimental import pallas as pl
from jax.experimental.pallas import tpu as pltpu


def _round_up(x, m):
    return (x + m - 1) // m * m


def _dueling_q_kernel(x_ref, w1_ref, wh_ref, wout_ref, bias_ref, out_ref, *,
                      hidden_dim, action_dim):
    H, A = hidden_dim, action_dim
    mm_dtype = w1_ref.dtype  # bf16 or f32, chosen once in the wrapper

    # Packed biases (f32): row 0 -> feature, row 1 -> fused hidden, row 2 -> fused out.
    b1 = bias_ref[0:1, :H]
    bh = bias_ref[1:2, :2 * H]
    bo = bias_ref[2:3, :1 + A]

    # Feature layer: ReLU(x @ W1 + b1)
    x = x_ref[...].astype(mm_dtype)
    h = jnp.dot(x, w1_ref[...], preferred_element_type=jnp.float32) + b1
    h = jnp.maximum(h, 0.0)

    # Fused hidden layer of both streams: ReLU(h @ [Wv1 | Wa1] + [bv1 | ba1]) -> [B, 2H]
    vh_ah = jnp.dot(h.astype(mm_dtype), wh_ref[...],
                    preferred_element_type=jnp.float32) + bh
    vh_ah = jnp.maximum(vh_ah, 0.0)

    # Fused output layer (block-diagonal): -> [B, 1 + A]; col 0 = value, cols 1.. = adv.
    va = jnp.dot(vh_ah.astype(mm_dtype), wout_ref[...],
                 preferred_element_type=jnp.float32) + bo

    value = va[:, 0:1]
    adv = va[:, 1:1 + A]
    adv_mean = jnp.sum(adv, axis=1, keepdims=True) * (1.0 / A)
    out_ref[...] = (value + adv - adv_mean).astype(out_ref.dtype)


def prepare_params(params, *, compute_dtype=jnp.float32):
    """One-time wrapper-side fusion of the 10 Linear params into 4 buffers."""
    (w1, b1, wv1, bv1, wv2, bv2, wa1, ba1, wa2, ba2) = params
    H = w1.shape[1]
    A = wa2.shape[1]

    # Fused hidden layer for both streams: [H, 2H]
    wh = jnp.concatenate([wv1, wa1], axis=1)
    bh = jnp.concatenate([bv1, ba1], axis=1)            # [1, 2H]

    # Block-diagonal fused output layer: [2H, 1 + A]
    wout = jnp.zeros((2 * H, 1 + A), jnp.float32)
    wout = wout.at[:H, 0:1].set(wv2)
    wout = wout.at[H:, 1:].set(wa2)
    bo = jnp.concatenate([bv2, ba2], axis=1)            # [1, 1 + A]

    # Single packed bias buffer (kept f32 for v5e-safe element-wise math).
    wb = max(H, 2 * H, 1 + A)
    bias = jnp.zeros((3, wb), jnp.float32)
    bias = bias.at[0, :H].set(b1[0])
    bias = bias.at[1, :2 * H].set(bh[0])
    bias = bias.at[2, :1 + A].set(bo[0])

    cd = compute_dtype
    return (w1.astype(cd), wh.astype(cd), wout.astype(cd), bias)


@functools.partial(jax.jit, static_argnames=("block_b",))
def dueling_q_forward(x, prepared, *, block_b=256):
    """x: [B, state_dim] -> q: [B, action_dim]."""
    w1, wh, wout, bias = prepared
    B, S = x.shape
    H = w1.shape[1]
    A = wout.shape[1] - 1

    # Tile the batch; pad it to a multiple of the tile so BlockSpecs stay legal
    # (batch tile multiple of 8 sublanes; feature dims use full array extents).
    tb = min(block_b, _round_up(B, 8))
    Bp = _round_up(B, tb)
    if Bp != B:
        x = jnp.pad(x, ((0, Bp - B), (0, 0)))
    grid = (Bp // tb,)

    kernel = functools.partial(_dueling_q_kernel, hidden_dim=H, action_dim=A)

    itemsize = jnp.dtype(w1.dtype).itemsize
    flops = 2 * Bp * (S * H + H * 2 * H + 2 * H * (1 + A))
    bytes_accessed = (Bp * S * 4 + w1.size * itemsize + wh.size * itemsize
                      + wout.size * itemsize + bias.size * 4 + Bp * A * 4)

    out = pl.pallas_call(
        kernel,
        out_shape=jax.ShapeDtypeStruct((Bp, A), jnp.float32),
        grid=grid,
        in_specs=[
            pl.BlockSpec((tb, S), lambda i: (i, 0)),        # x: tiled over batch
            pl.BlockSpec(w1.shape, lambda i: (0, 0)),       # weights: VMEM-resident
            pl.BlockSpec(wh.shape, lambda i: (0, 0)),
            pl.BlockSpec(wout.shape, lambda i: (0, 0)),
            pl.BlockSpec(bias.shape, lambda i: (0, 0)),     # packed biases
        ],
        out_specs=pl.BlockSpec((tb, A), lambda i: (i, 0)),
        compiler_params=pltpu.CompilerParams(
            dimension_semantics=("parallel",)),             # shard batch across TCs
        cost_estimate=pl.CostEstimate(
            flops=flops, transcendentals=0, bytes_accessed=bytes_accessed),
    )(x, w1, wh, wout, bias)
    return out[:B]


def init_params(key, state_dim, action_dim, hidden_dim):
    """Deterministic synthetic init; weights stored (in, out) == PyTorch W^T."""
    ks = jax.random.split(key, 10)

    def lin(kw, kb, fan_in, fan_out):
        bound = 1.0 / jnp.sqrt(fan_in)
        w = jax.random.uniform(kw, (fan_in, fan_out), jnp.float32, -bound, bound)
        b = jax.random.uniform(kb, (1, fan_out), jnp.float32, -bound, bound)
        return w, b

    w1, b1 = lin(ks[0], ks[1], state_dim, hidden_dim)
    wv1, bv1 = lin(ks[2], ks[3], hidden_dim, hidden_dim)
    wv2, bv2 = lin(ks[4], ks[5], hidden_dim, 1)
    wa1, ba1 = lin(ks[6], ks[7], hidden_dim, hidden_dim)
    wa2, ba2 = lin(ks[8], ks[9], hidden_dim, action_dim)
    return (w1, b1, wv1, bv1, wv2, bv2, wa1, ba1, wa2, ba2)


def reference_forward(x, params):
    (w1, b1, wv1, bv1, wv2, bv2, wa1, ba1, wa2, ba2) = params
    h = jnp.maximum(x @ w1 + b1, 0.0)
    v = jnp.maximum(h @ wv1 + bv1, 0.0) @ wv2 + bv2
    a = jnp.maximum(h @ wa1 + ba1, 0.0) @ wa2 + ba2
    return v + a - jnp.mean(a, axis=1, keepdims=True)


if __name__ == "__main__":
    batch, state_dim, action_dim, hidden_dim = 8, 16, 4, 32

    key = jax.random.PRNGKey(0)
    kx, kp = jax.random.split(key)
    x = jax.random.normal(kx, (batch, state_dim), jnp.float32)
    params = init_params(kp, state_dim, action_dim, hidden_dim)
    q_ref = reference_forward(x, params)

    # f32 path (exact-ish vs reference).
    prepared_f32 = prepare_params(params, compute_dtype=jnp.float32)
    q = jax.block_until_ready(dueling_q_forward(x, prepared_f32))
    assert q.shape == (batch, action_dim)
    assert jnp.allclose(q, q_ref, atol=1e-5, rtol=1e-5), "f32 mismatch vs reference"

    # bf16 matmul path (MXU-native on v6e/v7x; element-wise math stays f32).
    prepared_bf16 = prepare_params(params, compute_dtype=jnp.bfloat16)
    q_bf16 = jax.block_until_ready(dueling_q_forward(x, prepared_bf16))
    assert jnp.allclose(q_bf16, q_ref, atol=1e-1, rtol=1e-1), "bf16 mismatch vs reference"

    # Exercise the batch grid (grid=3 with padding) on a modest batch.
    xb = jax.random.normal(kx, (40, state_dim), jnp.float32)
    qb = jax.block_until_ready(dueling_q_forward(xb, prepared_f32, block_b=16))
    assert jnp.allclose(qb, reference_forward(xb, params), atol=1e-5, rtol=1e-5), \
        "grid path mismatch vs reference"

    print("KERNEL_OK")
</pallas_src>

<mosaic_0001>
module attributes {stable_mosaic.version = 11 : i64} {
  func.func @_dueling_q_kernel(%arg0: i32, %arg1: memref<8x16xf32, #tpu.memory_space<vmem>>, %arg2: memref<16x32xf32, #tpu.memory_space<vmem>>, %arg3: memref<32x64xf32, #tpu.memory_space<vmem>>, %arg4: memref<64x5xf32, #tpu.memory_space<vmem>>, %arg5: memref<3x64xf32, #tpu.memory_space<vmem>>, %arg6: memref<8x4xf32, #tpu.memory_space<vmem>>) attributes {dimension_semantics = [#tpu.dimension_semantics<parallel>], iteration_bounds = array<i64: 1>, scalar_prefetch = 0 : i64, scratch_operands = 0 : i64, tpu.core_type = #tpu.core_type<tc>, window_params = [{transform_indices = @transform_0, window_bounds = array<i64: 8, 16>}, {pipeline_mode = #tpu.pipeline_mode<synchronous>, transform_indices = @transform_1, window_bounds = array<i64: 16, 32>}, {pipeline_mode = #tpu.pipeline_mode<synchronous>, transform_indices = @transform_2, window_bounds = array<i64: 32, 64>}, {pipeline_mode = #tpu.pipeline_mode<synchronous>, transform_indices = @transform_3, window_bounds = array<i64: 64, 5>}, {pipeline_mode = #tpu.pipeline_mode<synchronous>, transform_indices = @transform_4, window_bounds = array<i64: 3, 64>}, {transform_indices = @transform_5, window_bounds = array<i64: 8, 4>}]} {
    %c0 = arith.constant 0 : index
    %c0_0 = arith.constant 0 : index
    %0 = vector.load %arg5[%c0, %c0_0] : memref<3x64xf32, #tpu.memory_space<vmem>>, vector<1x32xf32>
    %c1 = arith.constant 1 : index
    %c0_1 = arith.constant 0 : index
    %1 = vector.load %arg5[%c1, %c0_1] : memref<3x64xf32, #tpu.memory_space<vmem>>, vector<1x64xf32>
    %c2 = arith.constant 2 : index
    %c0_2 = arith.constant 0 : index
    %2 = vector.load %arg5[%c2, %c0_2] : memref<3x64xf32, #tpu.memory_space<vmem>>, vector<1x5xf32>
    %c0_3 = arith.constant 0 : index
    %c0_4 = arith.constant 0 : index
    %3 = vector.load %arg1[%c0_3, %c0_4] : memref<8x16xf32, #tpu.memory_space<vmem>>, vector<8x16xf32>
    %c0_5 = arith.constant 0 : index
    %c0_6 = arith.constant 0 : index
    %4 = vector.load %arg2[%c0_5, %c0_6] : memref<16x32xf32, #tpu.memory_space<vmem>>, vector<16x32xf32>
    %cst = arith.constant dense<0.000000e+00> : vector<8x32xf32>
    %5 = tpu.matmul %3, %4, %cst {dimension_numbers = #tpu.dot_dimension_numbers<[1], [0], [0], [1], [0, 0, 1, 1], [], []>} : vector<8x16xf32>, vector<16x32xf32>, vector<8x32xf32> -> vector<8x32xf32>
    %6 = vector.broadcast %0 : vector<1x32xf32> to vector<8x32xf32>
    %7 = arith.addf %5, %6 : vector<8x32xf32>
    %cst_7 = arith.constant 0.000000e+00 : f32
    %8 = vector.broadcast %cst_7 : f32 to vector<8x32xf32>
    %9 = arith.maximumf %7, %8 : vector<8x32xf32>
    %c0_8 = arith.constant 0 : index
    %c0_9 = arith.constant 0 : index
    %10 = vector.load %arg3[%c0_8, %c0_9] : memref<32x64xf32, #tpu.memory_space<vmem>>, vector<32x64xf32>
    %cst_10 = arith.constant dense<0.000000e+00> : vector<8x64xf32>
    %11 = tpu.matmul %9, %10, %cst_10 {dimension_numbers = #tpu.dot_dimension_numbers<[1], [0], [0], [1], [0, 0, 1, 1], [], []>} : vector<8x32xf32>, vector<32x64xf32>, vector<8x64xf32> -> vector<8x64xf32>
    %12 = vector.broadcast %1 : vector<1x64xf32> to vector<8x64xf32>
    %13 = arith.addf %11, %12 : vector<8x64xf32>
    %cst_11 = arith.constant 0.000000e+00 : f32
    %14 = vector.broadcast %cst_11 : f32 to vector<8x64xf32>
    %15 = arith.maximumf %13, %14 : vector<8x64xf32>
    %c0_12 = arith.constant 0 : index
    %c0_13 = arith.constant 0 : index
    %16 = vector.load %arg4[%c0_12, %c0_13] : memref<64x5xf32, #tpu.memory_space<vmem>>, vector<64x5xf32>
    %cst_14 = arith.constant dense<0.000000e+00> : vector<8x5xf32>
    %17 = tpu.matmul %15, %16, %cst_14 {dimension_numbers = #tpu.dot_dimension_numbers<[1], [0], [0], [1], [0, 0, 1, 1], [], []>} : vector<8x64xf32>, vector<64x5xf32>, vector<8x5xf32> -> vector<8x5xf32>
    %18 = vector.broadcast %2 : vector<1x5xf32> to vector<8x5xf32>
    %19 = arith.addf %17, %18 : vector<8x5xf32>
    %20 = vector.extract_strided_slice %19 {offsets = [0, 0], sizes = [8, 1], strides = [1, 1]} : vector<8x5xf32> to vector<8x1xf32>
    %21 = vector.extract_strided_slice %19 {offsets = [0, 1], sizes = [8, 4], strides = [1, 1]} : vector<8x5xf32> to vector<8x4xf32>
    %cst_15 = arith.constant dense<0.000000e+00> : vector<8xf32>
    %22 = vector.multi_reduction <add>, %21, %cst_15 [1] : vector<8x4xf32> to vector<8xf32>
    %23 = vector.shape_cast %22 : vector<8xf32> to vector<8x1xf32>
    %cst_16 = arith.constant 2.500000e-01 : f32
    %24 = vector.broadcast %cst_16 : f32 to vector<8x1xf32>
    %25 = arith.mulf %23, %24 : vector<8x1xf32>
    %26 = vector.broadcast %20 : vector<8x1xf32> to vector<8x4xf32>
    %27 = arith.addf %26, %21 : vector<8x4xf32>
    %28 = vector.broadcast %25 : vector<8x1xf32> to vector<8x4xf32>
    %29 = arith.subf %27, %28 : vector<8x4xf32>
    %c0_17 = arith.constant 0 : index
    %c0_18 = arith.constant 0 : index
    %30 = vector.load %arg6[%c0_17, %c0_18] : memref<8x4xf32, #tpu.memory_space<vmem>>, vector<8x4xf32>
    tpu.vector_store %arg6[%c0_17, %c0_18], %29 {strides = array<i32>} : memref<8x4xf32, #tpu.memory_space<vmem>>, vector<8x4xf32>,
    return
  }
  func.func @transform_0(%arg0: i32) -> (i32, i32) {
    %c0_i32 = arith.constant 0 : i32
    %c0_i32_0 = arith.constant 0 : i32
    return %arg0, %c0_i32 : i32, i32
  }
  func.func @transform_1(%arg0: i32) -> (i32, i32) {
    %c0_i32 = arith.constant 0 : i32
    %c0_i32_0 = arith.constant 0 : i32
    %c0_i32_1 = arith.constant 0 : i32
    return %c0_i32, %c0_i32_0 : i32, i32
  }
  func.func @transform_2(%arg0: i32) -> (i32, i32) {
    %c0_i32 = arith.constant 0 : i32
    %c0_i32_0 = arith.constant 0 : i32
    %c0_i32_1 = arith.constant 0 : i32
    return %c0_i32, %c0_i32_0 : i32, i32
  }
  func.func @transform_3(%arg0: i32) -> (i32, i32) {
    %c0_i32 = arith.constant 0 : i32
    %c0_i32_0 = arith.constant 0 : i32
    %c0_i32_1 = arith.constant 0 : i32
    return %c0_i32, %c0_i32_0 : i32, i32
  }
  func.func @transform_4(%arg0: i32) -> (i32, i32) {
    %c0_i32 = arith.constant 0 : i32
    %c0_i32_0 = arith.constant 0 : i32
    %c0_i32_1 = arith.constant 0 : i32
    return %c0_i32, %c0_i32_0 : i32, i32
  }
  func.func @transform_5(%arg0: i32) -> (i32, i32) {
    %c0_i32 = arith.constant 0 : i32
    %c0_i32_0 = arith.constant 0 : i32
    return %arg0, %c0_i32 : i32, i32
  }
}

</mosaic_0001>

<llo_original>
// kernel: dueling_q_forward.1
$region0: #{dueling_q_forward.1}
  #allocation0 [shape = 'u32[]', space=smem, size = 0x4, offset = 0x4, fixed_abs, tag = 'smem constant byte address 0x4 - core index']
  #allocation1 [shape = 'u32[144,128]{1,0:T(1,128)}', space=vmem, size = 0x12000, scoped, tag = 'internal scratch']
  %s0 = inlined_call_operand.vmem [shape: f32[8,16], index: 0, kind: input, shape index: {}]
  %s1 = inlined_call_operand.vmem [shape: f32[16,32], index: 1, kind: input, shape index: {}]
  %s2 = inlined_call_operand.vmem [shape: f32[32,64], index: 2, kind: input, shape index: {}]
  %s3 = inlined_call_operand.vmem [shape: f32[64,5], index: 3, kind: input, shape index: {}]
  %s4 = inlined_call_operand.vmem [shape: f32[3,64], index: 4, kind: input, shape index: {}]
  %s5 = inlined_call_operand.vmem [shape: f32[8,4], index: 5, kind: output, shape index: {}]
  %s6 = sld [smem:[#allocation0]]
  $region30: #{dueling_q_forward.1} parent=0
    _
  %s8 = ssub.s32 1, %s6
  %s9 = scalar_select 0, %s8, %s6
  // Predicated region
  $region2: #{dueling_q_forward.1} parent=0 // pred_check
    _
  $region3: #{dueling_q_forward.1} parent=0 // pred_check_branch
    %11 = sbr.rel (0) target = $region5
  $region4: #{dueling_q_forward.1} parent=0 // pred_region
    _
  $region5: #{dueling_q_forward.1} parent=0 // pred_fallthru
    _
  // Predicated region
  $region6: #{dueling_q_forward.1} parent=0 // pred_check
    _
  $region7: #{dueling_q_forward.1} parent=0 // pred_check_branch
    %13 = sbr.rel (0) target = $region9
  $region8: #{dueling_q_forward.1} parent=0 // pred_region
    _
  $region9: #{dueling_q_forward.1} parent=0 // pred_fallthru
    _
  // Predicated region
  $region10: #{dueling_q_forward.1} parent=0 // pred_check
    _
  $region11: #{dueling_q_forward.1} parent=0 // pred_check_branch
    %15 = sbr.rel (0) target = $region13
  $region12: #{dueling_q_forward.1} parent=0 // pred_region
    _
  $region13: #{dueling_q_forward.1} parent=0 // pred_fallthru
    _
  // Predicated region
  $region14: #{dueling_q_forward.1} parent=0 // pred_check
    _
  $region15: #{dueling_q_forward.1} parent=0 // pred_check_branch
    %17 = sbr.rel (0) target = $region17
  $region16: #{dueling_q_forward.1} parent=0 // pred_region
    _
  $region17: #{dueling_q_forward.1} parent=0 // pred_fallthru
    _
  // Predicated region
  $region18: #{dueling_q_forward.1} parent=0 // pred_check
    _
  $region19: #{dueling_q_forward.1} parent=0 // pred_check_branch
    %19 = sbr.rel (0) target = $region21
  $region20: #{dueling_q_forward.1} parent=0 // pred_region
    _
  $region21: #{dueling_q_forward.1} parent=0 // pred_fallthru
    _
  %v20 = vld [vmem:[%s4] sm:$0x1]
  %v21 = vld [vmem:[%s4 + $0x1] sm:$0x1]
  %v22 = vld [vmem:[%s4 + $0x2] sm:$0x1]
  %v23 = vld [vmem:[%s0] sm:$0xff]
  %v24 = vld [vmem:[%s1] sm:$0xff]
  %v25 = vld [vmem:[%s1 + $0x8] sm:$0xff]
  %v26 = vlaneseq
  %v27 = vshrl.u32 %v26, 7
  %v28 = vsub.s32 0, %v27
  %v29 = vrot.slane %v20, %v28
  %vm30 = vcmask 130048
  %v32 = vsel %vm30, %v23, 0
  %34 = vmatprep.subr.mxu0 0.0
  %35 = vmatpush1.msra.mxu0 %v24
  %36 = vmatprep.subr.mxu0 0.0
  %37 = vmatpush1.msra.mxu0 %v25
  %38 = vmatprep.subr.mxu0 0.0
  %39 = vmatpush1.msra.mxu0 0.0
  %40 = vmatprep.subr.mxu0 0.0
  %41 = vmatpush1.msra.mxu0 0.0
  %42 = vmatprep.subr.mxu0 0.0
  %43 = vmatpush1.msra.mxu0 0.0
  %44 = vmatprep.subr.mxu0 0.0
  %45 = vmatpush1.msra.mxu0 0.0
  %46 = vmatprep.subr.mxu0 0.0
  %47 = vmatpush1.msra.mxu0 0.0
  %48 = vmatprep.subr.mxu0 0.0
  %49 = vmatpush1.msra.mxu0 0.0
  %50 = vmatprep.subr.mxu0 0.0
  %51 = vmatpush1.msra.mxu0 0.0
  %52 = vmatprep.subr.mxu0 0.0
  %53 = vmatpush1.msra.mxu0 0.0
  %54 = vmatprep.subr.mxu0 0.0
  %55 = vmatpush1.msra.mxu0 0.0
  %56 = vmatprep.subr.mxu0 0.0
  %57 = vmatpush1.msra.mxu0 0.0
  %58 = vmatprep.subr.mxu0 0.0
  %59 = vmatpush1.msra.mxu0 0.0
  %60 = vmatprep.subr.mxu0 0.0
  %61 = vmatpush1.msra.mxu0 0.0
  %62 = vmatprep.subr.mxu0 0.0
  %63 = vmatpush1.msra.mxu0 0.0
  %64 = vmatprep.subr.mxu0 0.0
  %65 = vmatpush1.msra.mxu0 0.0
  %66 = vmatprep.subr.mxu0 0.0
  %67 = vmatpush1.msra.mxu0 0.0
  %68 = vmatprep.subr.mxu0 0.0
  %69 = vmatpush1.msra.mxu0 0.0
  %70 = vmatprep.subr.mxu0 0.0
  %71 = vmatpush1.msra.mxu0 0.0
  %72 = vmatprep.subr.mxu0 0.0
  %73 = vmatpush1.msra.mxu0 0.0
  %74 = vmatprep.subr.mxu0 0.0
  %75 = vmatpush1.msra.mxu0 0.0
  %76 = vmatprep.subr.mxu0 0.0
  %77 = vmatpush1.msra.mxu0 0.0
  %78 = vmatprep.subr.mxu0 0.0
  %79 = vmatpush1.msra.mxu0 0.0
  %80 = vmatprep.subr.mxu0 0.0
  %81 = vmatpush1.msra.mxu0 0.0
  %82 = vmatprep.subr.mxu0 0.0
  %83 = vmatpush1.msra.mxu0 0.0
  %84 = vmatprep.subr.mxu0 0.0
  %85 = vmatpush1.msra.mxu0 0.0
  %86 = vmatprep.subr.mxu0 0.0
  %87 = vmatpush1.msra.mxu0 0.0
  %88 = vmatprep.subr.mxu0 0.0
  %89 = vmatpush1.msra.mxu0 0.0
  %90 = vmatprep.subr.mxu0 0.0
  %91 = vmatpush1.msra.mxu0 0.0
  %92 = vmatprep.subr.mxu0 0.0
  %93 = vmatpush1.msra.mxu0 0.0
  %94 = vmatprep.subr.mxu0 0.0
  %95 = vmatpush1.msra.mxu0 0.0
  %96 = vmatprep.subr.mxu0 0.0
  %97 = vmatpush1.msra.mxu0 0.0
  %98 = vmatprep.mubr.f32.mxu0 0.0
  %99 = vmatmul.mubr.f32.gmra.mrb[0].mxu0 %v32
  %v100 = vpop.f32.mrb[0].mxu0
  %v101 = vadd.f32 %v29, %v100
  %v102 = vpop.f32.mrb[0].mxu0
  %103 = vdwg.mxu0
  %v104 = vmax.f32 %v101, 0.0
  %v105 = vld [vmem:[%s2] sm:$0xff]
  %v106 = vld [vmem:[%s2 + $0x8] sm:$0xff]
  %v107 = vld [vmem:[%s2 + $0x10] sm:$0xff]
  %v108 = vld [vmem:[%s2 + $0x18] sm:$0xff]
  %v109 = vlaneseq
  %v110 = vshrl.u32 %v109, 7
  %v111 = vsub.s32 0, %v110
  %v112 = vrot.slane %v21, %v111
  %vm113 = vcmask 261120
  %v115 = vsel %vm113, %v104, 0
  %117 = vmatprep.subr.mxu0 0.0
  %118 = vmatpush1.msra.mxu0 %v105
  %119 = vmatprep.subr.mxu0 0.0
  %120 = vmatpush1.msra.mxu0 %v106
  %121 = vmatprep.subr.mxu0 0.0
  %122 = vmatpush1.msra.mxu0 %v107
  %123 = vmatprep.subr.mxu0 0.0
  %124 = vmatpush1.msra.mxu0 %v108
  %125 = vmatprep.subr.mxu0 0.0
  %126 = vmatpush1.msra.mxu0 0.0
  %127 = vmatprep.subr.mxu0 0.0
  %128 = vmatpush1.msra.mxu0 0.0
  %129 = vmatprep.subr.mxu0 0.0
  %130 = vmatpush1.msra.mxu0 0.0
  %131 = vmatprep.subr.mxu0 0.0
  %132 = vmatpush1.msra.mxu0 0.0
  %133 = vmatprep.subr.mxu0 0.0
  %134 = vmatpush1.msra.mxu0 0.0
  %135 = vmatprep.subr.mxu0 0.0
  %136 = vmatpush1.msra.mxu0 0.0
  %137 = vmatprep.subr.mxu0 0.0
  %138 = vmatpush1.msra.mxu0 0.0
  %139 = vmatprep.subr.mxu0 0.0
  %140 = vmatpush1.msra.mxu0 0.0
  %141 = vmatprep.subr.mxu0 0.0
  %142 = vmatpush1.msra.mxu0 0.0
  %143 = vmatprep.subr.mxu0 0.0
  %144 = vmatpush1.msra.mxu0 0.0
  %145 = vmatprep.subr.mxu0 0.0
  %146 = vmatpush1.msra.mxu0 0.0
  %147 = vmatprep.subr.mxu0 0.0
  %148 = vmatpush1.msra.mxu0 0.0
  %149 = vmatprep.subr.mxu0 0.0
  %150 = vmatpush1.msra.mxu0 0.0
  %151 = vmatprep.subr.mxu0 0.0
  %152 = vmatpush1.msra.mxu0 0.0
  %153 = vmatprep.subr.mxu0 0.0
  %154 = vmatpush1.msra.mxu0 0.0
  %155 = vmatprep.subr.mxu0 0.0
  %156 = vmatpush1.msra.mxu0 0.0
  %157 = vmatprep.subr.mxu0 0.0
  %158 = vmatpush1.msra.mxu0 0.0
  %159 = vmatprep.subr.mxu0 0.0
  %160 = vmatpush1.msra.mxu0 0.0
  %161 = vmatprep.subr.mxu0 0.0
  %162 = vmatpush1.msra.mxu0 0.0
  %163 = vmatprep.subr.mxu0 0.0
  %164 = vmatpush1.msra.mxu0 0.0
  %165 = vmatprep.subr.mxu0 0.0
  %166 = vmatpush1.msra.mxu0 0.0
  %167 = vmatprep.subr.mxu0 0.0
  %168 = vmatpush1.msra.mxu0 0.0
  %169 = vmatprep.subr.mxu0 0.0
  %170 = vmatpush1.msra.mxu0 0.0
  %171 = vmatprep.subr.mxu0 0.0
  %172 = vmatpush1.msra.mxu0 0.0
  %173 = vmatprep.subr.mxu0 0.0
  %174 = vmatpush1.msra.mxu0 0.0
  %175 = vmatprep.subr.mxu0 0.0
  %176 = vmatpush1.msra.mxu0 0.0
  %177 = vmatprep.subr.mxu0 0.0
  %178 = vmatpush1.msra.mxu0 0.0
  %179 = vmatprep.subr.mxu0 0.0
  %180 = vmatpush1.msra.mxu0 0.0
  %181 = vmatprep.mubr.f32.mxu0 0.0
  %182 = vmatmul.mubr.f32.gmra.mrb[0].mxu0 %v115
  %v183 = vpop.f32.mrb[0].mxu0
  %v184 = vadd.f32 %v112, %v183
  %v185 = vpop.f32.mrb[0].mxu0
  %186 = vdwg.mxu0
  %v187 = vmax.f32 %v184, 0.0
  %v188 = vld [vmem:[%s3] sm:$0xff]
  %v189 = vld [vmem:[%s3 + $0x8] sm:$0xff]
  %v190 = vld [vmem:[%s3 + $0x10] sm:$0xff]
  %v191 = vld [vmem:[%s3 + $0x18] sm:$0xff]
  %v192 = vld [vmem:[%s3 + $0x20] sm:$0xff]
  %v193 = vld [vmem:[%s3 + $0x28] sm:$0xff]
  %v194 = vld [vmem:[%s3 + $0x30] sm:$0xff]
  %v195 = vld [vmem:[%s3 + $0x38] sm:$0xff]
  %v196 = vlaneseq
  %v197 = vshrl.u32 %v196, 7
  %v198 = vsub.s32 0, %v197
  %v199 = vrot.slane %v22, %v198
  %vm200 = vcmask 523264
  %v202 = vsel %vm200, %v187, 0
  %204 = vmatprep.subr.mxu0 0.0
  %205 = vmatpush1.msra.mxu0 %v188
  %206 = vmatprep.subr.mxu0 0.0
  %207 = vmatpush1.msra.mxu0 %v189
  %208 = vmatprep.subr.mxu0 0.0
  %209 = vmatpush1.msra.mxu0 %v190
  %210 = vmatprep.subr.mxu0 0.0
  %211 = vmatpush1.msra.mxu0 %v191
  %212 = vmatprep.subr.mxu0 0.0
  %213 = vmatpush1.msra.mxu0 %v192
  %214 = vmatprep.subr.mxu0 0.0
  %215 = vmatpush1.msra.mxu0 %v193
  %216 = vmatprep.subr.mxu0 0.0
  %217 = vmatpush1.msra.mxu0 %v194
  %218 = vmatprep.subr.mxu0 0.0
  %219 = vmatpush1.msra.mxu0 %v195
  %220 = vmatprep.subr.mxu0 0.0
  %221 = vmatpush1.msra.mxu0 0.0
  %222 = vmatprep.subr.mxu0 0.0
  %223 = vmatpush1.msra.mxu0 0.0
  %224 = vmatprep.subr.mxu0 0.0
  %225 = vmatpush1.msra.mxu0 0.0
  %226 = vmatprep.subr.mxu0 0.0
  %227 = vmatpush1.msra.mxu0 0.0
  %228 = vmatprep.subr.mxu0 0.0
  %229 = vmatpush1.msra.mxu0 0.0
  %230 = vmatprep.subr.mxu0 0.0
  %231 = vmatpush1.msra.mxu0 0.0
  %232 = vmatprep.subr.mxu0 0.0
  %233 = vmatpush1.msra.mxu0 0.0
  %234 = vmatprep.subr.mxu0 0.0
  %235 = vmatpush1.msra.mxu0 0.0
  %236 = vmatprep.subr.mxu0 0.0
  %237 = vmatpush1.msra.mxu0 0.0
  %238 = vmatprep.subr.mxu0 0.0
  %239 = vmatpush1.msra.mxu0 0.0
  %240 = vmatprep.subr.mxu0 0.0
  %241 = vmatpush1.msra.mxu0 0.0
  %242 = vmatprep.subr.mxu0 0.0
  %243 = vmatpush1.msra.mxu0 0.0
  %244 = vmatprep.subr.mxu0 0.0
  %245 = vmatpush1.msra.mxu0 0.0
  %246 = vmatprep.subr.mxu0 0.0
  %247 = vmatpush1.msra.mxu0 0.0
  %248 = vmatprep.subr.mxu0 0.0
  %249 = vmatpush1.msra.mxu0 0.0
  %250 = vmatprep.subr.mxu0 0.0
  %251 = vmatpush1.msra.mxu0 0.0
  %252 = vmatprep.subr.mxu0 0.0
  %253 = vmatpush1.msra.mxu0 0.0
  %254 = vmatprep.subr.mxu0 0.0
  %255 = vmatpush1.msra.mxu0 0.0
  %256 = vmatprep.subr.mxu0 0.0
  %257 = vmatpush1.msra.mxu0 0.0
  %258 = vmatprep.subr.mxu0 0.0
  %259 = vmatpush1.msra.mxu0 0.0
  %260 = vmatprep.subr.mxu0 0.0
  %261 = vmatpush1.msra.mxu0 0.0
  %262 = vmatprep.subr.mxu0 0.0
  %263 = vmatpush1.msra.mxu0 0.0
  %264 = vmatprep.subr.mxu0 0.0
  %265 = vmatpush1.msra.mxu0 0.0
  %266 = vmatprep.subr.mxu0 0.0
  %267 = vmatpush1.msra.mxu0 0.0
  %268 = vmatprep.mubr.f32.mxu0 0.0
  %269 = vmatmul.mubr.f32.gmra.mrb[0].mxu0 %v202
  %v270 = vpop.f32.mrb[0].mxu0
  %v271 = vadd.f32 %v199, %v270
  %v272 = vpop.f32.mrb[0].mxu0
  %273 = vdwg.mxu0
  %275 = vrot.lane.b32.xlu0 %v271, 127
  %v276 = vpop.permute.xlu0 %275
  %vm278 = vcmask 31744
  %v279 = vsel %vm278, %v276, 0.0
  %280 = vadd.xlane.f32.xlu0 %v279
  %v281 = vpop.xlane.xlu0 %280
  %v282 = vmul.f32 %v281, 0.25
  %283 = vset.pattern.permute.xlu0 0
  %284 = vperm.xlu0 %283, %v271
  %v285 = vpop.permute.xlu0 %284
  %v287 = vadd.f32 %v285, %v271
  %v288 = vsub.f32 %v287, %v282
  %290 = vrot.lane.b32.xlu0 %v288, 127
  %v291 = vpop.permute.xlu0 %290
  %293 = vst.msk [vmem:[%s5] sm:$0xff] %vm278, %v291
  // Predicated region
  $region22: #{dueling_q_forward.1} parent=0 // pred_check
    _
  $region23: #{dueling_q_forward.1} parent=0 // pred_check_branch
    %295 = sbr.rel (0) target = $region25
  $region24: #{dueling_q_forward.1} parent=0 // pred_region
    _
  $region25: #{dueling_q_forward.1} parent=0 // pred_fallthru
    _
  // Predicated region
  $region26: #{dueling_q_forward.1} parent=0 // pred_check
    _
  $region27: #{dueling_q_forward.1} parent=0 // pred_check_branch
    %297 = sbr.rel (0) target = $region29
  $region28: #{dueling_q_forward.1} parent=0 // pred_region
    _
  $region29: #{dueling_q_forward.1} parent=0 // pred_fallthru
    _

</llo_original>
